<compile_context>
chip_gen: v5e
topology: v5e:2x2
jax: 0.10.0
libtpu: 0.0.40
codegen_flags: <defaults>
</compile_context>

<pallas_src>
import functools

import jax
import jax.numpy as jnp
from jax import lax
from jax.experimental import pallas as pl
from jax.experimental.pallas import tpu as pltpu

LN_EPS = 1e-5
LEAKY_SLOPE = 0.2


def _round_up(n, m):
    return ((n + m - 1) // m) * m


def _vmem_limit_bytes():
    cap = 64 * 1024 * 1024                      # conservative fallback (v7x-sized)
    try:
        cap = int(pltpu.get_tpu_info().vmem_capacity_bytes)
    except Exception:
        pass
    # ~75% of physical, capped at 100 MiB: ~96 MiB on 128 MiB parts (v5e/v6e),
    # ~48 MiB on 64 MiB parts (v7x) — leaves headroom for the double-buffered x tile.
    return int(min(cap * 3 // 4, 100 * 1024 * 1024))


def _const_spec(arr):
    """Whole-array, constant-index-map, single-buffered parameter spec."""
    ndim = arr.ndim
    return pl.BlockSpec(
        arr.shape,
        lambda c, j, nv, _n=ndim: (0,) * _n,
        pipeline_mode=pl.Buffered(1),
    )


# ---------------------------------------------------------------------------
# Main kernel: all GAT layers (folded heads) + LayerNorm + per-chunk add-pool
# ---------------------------------------------------------------------------
def megan_layers_kernel(nvalid_ref, x_ref, *rest, num_layers, res_flags):
    layer_refs = [tuple(rest[3 * l:3 * l + 3]) for l in range(num_layers)]
    part_ref = rest[3 * num_layers]             # (8, hidden) per-chunk partial pool

    c = pl.program_id(0)                        # chunk index ("parallel")
    j = pl.program_id(1)                        # tile-within-chunk ("arbitrary")
    tile_m = x_ref.shape[0]

    @pl.when(j == 0)
    def _init():
        part_ref[...] = jnp.zeros_like(part_ref)

    # Stream x in a narrow dtype (bf16 by default); do ALL math in f32
    # (mandatory for LN on v5e, negligible extra cost elsewhere).
    h = x_ref[...].astype(jnp.float32)                                # [TM, Fin]
    for l in range(num_layers):
        w_ref, g_ref, b_ref = layer_refs[l]
        hw = jnp.dot(h, w_ref[...], preferred_element_type=jnp.float32)   # [TM, C]
        if res_flags[l]:                                              # dims match
            hw = hw + h
        mu = jnp.mean(hw, axis=-1, keepdims=True)
        var = jnp.mean(jnp.square(hw - mu), axis=-1, keepdims=True)
        h = (hw - mu) * lax.rsqrt(var + LN_EPS) * g_ref[...] + b_ref[...]

    # global_add_pool contribution: fold the tile into 8 sublane rows with plain
    # vreg adds (static 8-row slices); defer the 8->1 reduce to the epilogue.
    def sublane_partial_sum(v):                                       # [TM,C]->[8,C]
        acc = v[0:8, :]
        for g in range(1, tile_m // 8):
            acc = acc + v[8 * g:8 * (g + 1), :]
        return acc

    tile_start = (c * pl.num_programs(1) + j) * tile_m
    n_valid = nvalid_ref[0]

    @pl.when(tile_start + tile_m <= n_valid)          # full tile: no mask needed
    def _full_tile():
        part_ref[...] += sublane_partial_sum(h)

    @pl.when(tile_start + tile_m > n_valid)           # ragged / padded tail tile
    def _ragged_tile():
        rows = lax.broadcasted_iota(jnp.int32, (tile_m, 1), 0) + tile_start
        hm = jnp.where(rows < n_valid, h, 0.0)
        part_ref[...] += sublane_partial_sum(hm)


# ---------------------------------------------------------------------------
# Epilogue kernel: cross-chunk / cross-sublane pool reduce + MLP classifier
# ---------------------------------------------------------------------------
def classifier_kernel(part_ref, w1_ref, b1_ref, w2_ref, b2_ref, out_ref):
    g = jnp.sum(part_ref[...], axis=0, keepdims=True)                # [1, hidden]
    z = jnp.dot(g, w1_ref[...], preferred_element_type=jnp.float32) + b1_ref[...]
    z = jnp.maximum(z, 0.0)                                          # ReLU (Dropout: eval no-op)
    out_ref[...] = (jnp.dot(z, w2_ref[...], preferred_element_type=jnp.float32)
                    + b2_ref[...]).astype(out_ref.dtype)


# ---------------------------------------------------------------------------
# Wrapper
# ---------------------------------------------------------------------------
def megan_forward(x, edge_index, params, *, hidden, residual=True,
                  tile_m=None, num_chunks=None, input_dtype=jnp.bfloat16):
    """Forward of MEGANCore (eval mode, batch=None) as two fused Pallas calls."""
    # edge_index accepted for API parity; with add_self_loops=True the
    # attention-weighted aggregation equals x_proj (see header derivation), so
    # connectivity does not change the returned prediction.
    del edge_index

    n, fin = x.shape
    num_layers = len(params["layers"])
    vmem_limit = _vmem_limit_bytes()

    # ---- tile-size selection: biggest node tile the VMEM budget allows ----
    in_bytes = jnp.dtype(input_dtype).itemsize
    if tile_m is None:
        # 2 pipelined x buffers + ~3 f32 temporaries of width max(fin, hidden).
        per_row = 2 * fin * in_bytes + 12 * max(fin, hidden)
        tile_m = min(2048, (vmem_limit // 2) // max(per_row, 1))
    tile_m = min(int(tile_m), _round_up(n, 16))
    tile_m = max(16, _round_up(tile_m, 16))      # multiple of 16 (bf16 sublane packing)

    num_tiles = int(pl.cdiv(n, tile_m))
    if num_chunks is None:
        num_chunks = 2 if num_tiles >= 2 else 1   # one chunk per v7x TensorCore
    num_chunks = max(1, min(int(num_chunks), num_tiles))
    tpc = int(pl.cdiv(num_tiles, num_chunks))     # tiles per chunk

    # ---- fold the K explanation heads:  mean_k(h @ W_k) == h @ mean_k(W_k) ----
    w_effs, gammas, betas, res_flags = [], [], [], []
    in_dim = fin
    for (w_k, _att_k), (gamma, beta) in zip(params["layers"], params["ln"]):
        w_effs.append(jnp.mean(w_k, axis=0).astype(jnp.float32))      # [in_dim, hidden]
        gammas.append(gamma.reshape(1, hidden).astype(jnp.float32))
        betas.append(beta.reshape(1, hidden).astype(jnp.float32))
        res_flags.append(bool(residual and in_dim == hidden))
        in_dim = hidden

    # ---- stream x narrow; NO pad copy (ragged tail handled in-kernel) ----
    x_in = x if x.dtype == input_dtype else x.astype(input_dtype)

    def x_index_map(c, j, nv, _nt=num_tiles, _tpc=tpc):
        # Clamp fully-out-of-range tiles onto the last real tile; their pool
        # contribution is masked to zero in the kernel.
        return (jnp.minimum(c * _tpc + j, _nt - 1), 0)

    in_specs = [pl.BlockSpec((tile_m, fin), x_index_map)]
    inputs = [x_in]
    for l in range(num_layers):
        for arr in (w_effs[l], gammas[l], betas[l]):
            in_specs.append(_const_spec(arr))
            inputs.append(arr)

    kernel = functools.partial(
        megan_layers_kernel, num_layers=num_layers, res_flags=tuple(res_flags))

    partials = pl.pallas_call(
        kernel,
        out_shape=jax.ShapeDtypeStruct((num_chunks * 8, hidden), jnp.float32),
        grid_spec=pltpu.PrefetchScalarGridSpec(
            num_scalar_prefetch=1,                         # n_valid lives in SMEM
            grid=(num_chunks, tpc),
            in_specs=in_specs,
            out_specs=pl.BlockSpec((8, hidden), lambda c, j, nv: (c, 0)),
        ),
        compiler_params=pltpu.CompilerParams(
            # chunks are independent (split across v7x's 2 TCs); the inner axis
            # carries the per-chunk pool reduction -> sequential.
            dimension_semantics=("parallel", "arbitrary"),
            vmem_limit_bytes=vmem_limit,
        ),
    )(jnp.asarray([n], jnp.int32), *inputs)

    # ---- tiny epilogue: cross-chunk pool reduce + classifier MLP ----
    w1, b1, w2, b2 = params["cls"]
    out_ch = int(w2.shape[-1])
    return pl.pallas_call(
        classifier_kernel,
        out_shape=jax.ShapeDtypeStruct((1, out_ch), jnp.float32),
    )(partials,
      w1.astype(jnp.float32), b1.reshape(1, -1).astype(jnp.float32),
      w2.astype(jnp.float32), b2.reshape(1, -1).astype(jnp.float32))


# ---------------------------------------------------------------------------
# Pure-JAX reference implementing the FULL PyTorch forward (incl. the GATv2
# attention softmax) — validates the kernel's algebraic simplification.
# ---------------------------------------------------------------------------
def megan_reference(x, edge_index, params, *, residual=True):
    n = x.shape[0]
    row, col = edge_index[0], edge_index[1]
    # dst = col (the scatter/softmax index in the module), src = row.
    adj = jnp.zeros((n, n), jnp.float32).at[col, row].set(1.0)
    adj = jnp.maximum(adj, jnp.eye(n, dtype=jnp.float32))          # add_self_loops
    with jax.default_matmul_precision("float32"):
        h = x.astype(jnp.float32)
        for (w, att), (gamma, beta) in zip(params["layers"], params["ln"]):
            outs = []
            for k in range(w.shape[0]):
                xp = h @ w[k]                                      # [N, C]
                s = xp[:, None, :] + xp[None, :, :]                # [dst, src, C]
                s = jnp.where(s > 0, s, LEAKY_SLOPE * s)
                logits = jnp.sum(s * att[k].reshape(1, 1, -1), axis=-1)
                masked = jnp.where(adj > 0, logits, -1e30)
                e = jnp.exp(masked - masked.max(axis=1, keepdims=True)) * adj
                alpha = e / e.sum(axis=1, keepdims=True)           # softmax by dst
                # module's message is x_j = xp[col] scattered back onto col:
                outs.append(xp * alpha.sum(axis=1, keepdims=True))
            h_new = jnp.mean(jnp.stack(outs, 0), axis=0)
            if residual and h.shape[-1] == h_new.shape[-1]:
                h_new = h + h_new
            mu = h_new.mean(-1, keepdims=True)
            var = ((h_new - mu) ** 2).mean(-1, keepdims=True)
            h = (h_new - mu) / jnp.sqrt(var + LN_EPS) * gamma + beta
        g = h.sum(0, keepdims=True)                                # global_add_pool
        w1, b1, w2, b2 = params["cls"]
        z = jnp.maximum(g @ w1 + b1.reshape(1, -1), 0.0)
        return z @ w2 + b2.reshape(1, -1)


# ---------------------------------------------------------------------------
# Parameter construction (deterministic, synthetic — mirrors module __init__,
# with LN/bias parameters slightly perturbed so the affine paths are exercised)
# ---------------------------------------------------------------------------
def xavier_uniform(key, shape, fan_in, fan_out):
    bound = (6.0 / (fan_in + fan_out)) ** 0.5
    return jax.random.uniform(key, shape, jnp.float32, -bound, bound)


def init_params(key, in_channels, hidden, out_channels, num_layers, k_heads):
    params = {"layers": [], "ln": [], "cls": None}
    for layer_idx in range(num_layers):
        fin = in_channels if layer_idx == 0 else hidden
        key, kw, ka, kg, kb = jax.random.split(key, 5)
        w = xavier_uniform(kw, (k_heads, fin, hidden), fin, hidden)
        att = xavier_uniform(ka, (k_heads, 1, hidden), hidden, hidden)
        params["layers"].append((w, att))
        gamma = 1.0 + 0.1 * jax.random.normal(kg, (1, hidden), jnp.float32)
        beta = 0.1 * jax.random.normal(kb, (1, hidden), jnp.float32)
        params["ln"].append((gamma, beta))
    h2 = hidden // 2
    key, k1, kb1, k2, kb2 = jax.random.split(key, 5)
    w1 = xavier_uniform(k1, (hidden, h2), hidden, h2)
    b1 = 0.1 * jax.random.normal(kb1, (1, h2), jnp.float32)
    w2 = xavier_uniform(k2, (h2, out_channels), h2, out_channels)
    b2 = 0.1 * jax.random.normal(kb2, (1, out_channels), jnp.float32)
    params["cls"] = (w1, b1, w2, b2)
    return params


if __name__ == "__main__":
    N = 29            # nodes (deliberately not a multiple of the tile size)
    IN_CH = 8         # node feature dim
    HIDDEN = 32       # hidden_channels
    OUT_CH = 1        # out_channels
    NUM_LAYERS = 2
    K = 2             # explanation heads

    key = jax.random.PRNGKey(0)
    key, kx = jax.random.split(key)
    x = jax.random.normal(kx, (N, IN_CH), jnp.float32)

    # undirected ring graph: i <-> (i+1) % N
    src = jnp.arange(N, dtype=jnp.int32)
    dst = (src + 1) % N
    edge_index = jnp.concatenate(
        [jnp.stack([src, dst]), jnp.stack([dst, src])], axis=1)       # [2, 58]

    params = init_params(key, IN_CH, HIDDEN, OUT_CH, NUM_LAYERS, K)

    fwd = jax.jit(
        megan_forward,
        static_argnames=("hidden", "residual", "tile_m", "num_chunks", "input_dtype"))

    # Path 1 (default bf16 streaming): small explicit tiles + 2 chunks, which
    # exercises the multi-tile / multi-chunk / ragged-tail / masked-pool paths.
    out_bf16 = jax.block_until_ready(
        fwd(x, edge_index, params, hidden=HIDDEN, tile_m=16, num_chunks=2))

    # Path 2 (f32 streaming): default single-tile tiling.
    out_f32 = jax.block_until_ready(
        fwd(x, edge_index, params, hidden=HIDDEN, input_dtype=jnp.float32))

    assert out_bf16.shape == (1, OUT_CH) and out_f32.shape == (1, OUT_CH)
    assert bool(jnp.all(jnp.isfinite(out_bf16)))
    assert bool(jnp.all(jnp.isfinite(out_f32)))

    # Validate against the full (attention-included) reference.  Tolerance is
    # set by the MXU/XLA default f32 matmul pass rounding (bf16-level mantissas
    # on the TPU side of both computations) plus the head-fold / tiled-pool
    # summation-order differences — it is NOT hiding a semantic mismatch.
    ref_f32 = megan_reference(x, edge_index, params)
    x_q = x.astype(jnp.bfloat16).astype(jnp.float32)       # same input quantization
    ref_bf16 = megan_reference(x_q, edge_index, params)

    assert bool(jnp.allclose(out_f32, ref_f32, atol=5e-2, rtol=5e-2)), (out_f32, ref_f32)
    assert bool(jnp.allclose(out_bf16, ref_bf16, atol=5e-2, rtol=5e-2)), (out_bf16, ref_bf16)
    assert bool(jnp.allclose(out_bf16, out_f32, atol=5e-2, rtol=5e-2)), (out_bf16, out_f32)

    print("KERNEL_OK")
</pallas_src>

<mosaic_0001>
module attributes {stable_mosaic.version = 11 : i64} {
  func.func @classifier_kernel(%arg0: memref<16x32xf32, #tpu.memory_space<vmem>>, %arg1: memref<32x16xf32, #tpu.memory_space<vmem>>, %arg2: memref<1x16xf32, #tpu.memory_space<vmem>>, %arg3: memref<16x1xf32, #tpu.memory_space<vmem>>, %arg4: memref<1x1xf32, #tpu.memory_space<vmem>>, %arg5: memref<1x1xf32, #tpu.memory_space<vmem>>) attributes {dimension_semantics = [], scalar_prefetch = 0 : i64, scratch_operands = 0 : i64, tpu.core_type = #tpu.core_type<tc>} {
    %c0 = arith.constant 0 : index
    %c0_0 = arith.constant 0 : index
    %0 = vector.load %arg0[%c0, %c0_0] : memref<16x32xf32, #tpu.memory_space<vmem>>, vector<16x32xf32>
    %cst = arith.constant dense<0.000000e+00> : vector<32xf32>
    %1 = vector.multi_reduction <add>, %0, %cst [0] : vector<16x32xf32> to vector<32xf32>
    %2 = vector.shape_cast %1 : vector<32xf32> to vector<1x32xf32>
    %c0_1 = arith.constant 0 : index
    %c0_2 = arith.constant 0 : index
    %3 = vector.load %arg1[%c0_1, %c0_2] : memref<32x16xf32, #tpu.memory_space<vmem>>, vector<32x16xf32>
    %cst_3 = arith.constant dense<0.000000e+00> : vector<1x16xf32>
    %4 = tpu.matmul %2, %3, %cst_3 {dimension_numbers = #tpu.dot_dimension_numbers<[1], [0], [0], [1], [0, 0, 1, 1], [], []>} : vector<1x32xf32>, vector<32x16xf32>, vector<1x16xf32> -> vector<1x16xf32>
    %c0_4 = arith.constant 0 : index
    %c0_5 = arith.constant 0 : index
    %5 = vector.load %arg2[%c0_4, %c0_5] : memref<1x16xf32, #tpu.memory_space<vmem>>, vector<1x16xf32>
    %6 = arith.addf %4, %5 : vector<1x16xf32>
    %cst_6 = arith.constant 0.000000e+00 : f32
    %7 = vector.broadcast %cst_6 : f32 to vector<1x16xf32>
    %8 = arith.maximumf %6, %7 : vector<1x16xf32>
    %c0_7 = arith.constant 0 : index
    %c0_8 = arith.constant 0 : index
    %9 = vector.load %arg3[%c0_7, %c0_8] : memref<16x1xf32, #tpu.memory_space<vmem>>, vector<16x1xf32>
    %cst_9 = arith.constant dense<0.000000e+00> : vector<1x1xf32>
    %10 = tpu.matmul %8, %9, %cst_9 {dimension_numbers = #tpu.dot_dimension_numbers<[1], [0], [0], [1], [0, 0, 1, 1], [], []>} : vector<1x16xf32>, vector<16x1xf32>, vector<1x1xf32> -> vector<1x1xf32>
    %c0_10 = arith.constant 0 : index
    %c0_11 = arith.constant 0 : index
    %11 = vector.load %arg4[%c0_10, %c0_11] : memref<1x1xf32, #tpu.memory_space<vmem>>, vector<1x1xf32>
    %12 = arith.addf %10, %11 : vector<1x1xf32>
    %c0_12 = arith.constant 0 : index
    %c0_13 = arith.constant 0 : index
    %13 = vector.load %arg5[%c0_12, %c0_13] : memref<1x1xf32, #tpu.memory_space<vmem>>, vector<1x1xf32>
    tpu.vector_store %arg5[%c0_12, %c0_13], %12 {strides = array<i32>} : memref<1x1xf32, #tpu.memory_space<vmem>>, vector<1x1xf32>,
    return
  }
}

module attributes {stable_mosaic.version = 11 : i64} {
  func.func @megan_layers_kernel(%arg0: i32, %arg1: i32, %arg2: memref<1xi32, #tpu.memory_space<smem>>, %arg3: memref<16x8xbf16, #tpu.memory_space<vmem>>, %arg4: memref<8x32xf32, #tpu.memory_space<vmem>>, %arg5: memref<1x32xf32, #tpu.memory_space<vmem>>, %arg6: memref<1x32xf32, #tpu.memory_space<vmem>>, %arg7: memref<32x32xf32, #tpu.memory_space<vmem>>, %arg8: memref<1x32xf32, #tpu.memory_space<vmem>>, %arg9: memref<1x32xf32, #tpu.memory_space<vmem>>, %arg10: memref<8x32xf32, #tpu.memory_space<vmem>>) attributes {dimension_semantics = [#tpu.dimension_semantics<parallel>, #tpu.dimension_semantics<arbitrary>], iteration_bounds = array<i64: 2, 1>, scalar_prefetch = 1 : i64, scratch_operands = 0 : i64, tpu.core_type = #tpu.core_type<tc>, window_params = [{transform_indices = @transform_0, window_bounds = array<i64: 16, 8>}, {pipeline_mode = #tpu.pipeline_mode<synchronous>, transform_indices = @transform_1, window_bounds = array<i64: 8, 32>}, {pipeline_mode = #tpu.pipeline_mode<synchronous>, transform_indices = @transform_2, window_bounds = array<i64: 1, 32>}, {pipeline_mode = #tpu.pipeline_mode<synchronous>, transform_indices = @transform_3, window_bounds = array<i64: 1, 32>}, {pipeline_mode = #tpu.pipeline_mode<synchronous>, transform_indices = @transform_4, window_bounds = array<i64: 32, 32>}, {pipeline_mode = #tpu.pipeline_mode<synchronous>, transform_indices = @transform_5, window_bounds = array<i64: 1, 32>}, {pipeline_mode = #tpu.pipeline_mode<synchronous>, transform_indices = @transform_6, window_bounds = array<i64: 1, 32>}, {transform_indices = @transform_7, window_bounds = array<i64: 8, 32>}]} {
    %c0_i32 = arith.constant 0 : i32
    %0 = arith.cmpi eq, %arg1, %c0_i32 : i32
    %1 = arith.extui %0 : i1 to i32
    %c0_i32_0 = arith.constant 0 : i32
    %2 = arith.cmpi ne, %1, %c0_i32_0 : i32
    scf.if %2 {
      %cst_30 = arith.constant 0.000000e+00 : f32
      %70 = vector.broadcast %cst_30 : f32 to vector<8x32xf32>
      %c0_31 = arith.constant 0 : index
      %c0_32 = arith.constant 0 : index
      %71 = vector.load %arg10[%c0_31, %c0_32] : memref<8x32xf32, #tpu.memory_space<vmem>>, vector<8x32xf32>
      tpu.vector_store %arg10[%c0_31, %c0_32], %70 {strides = array<i32>} : memref<8x32xf32, #tpu.memory_space<vmem>>, vector<8x32xf32>,
    } else {
    }
    %c0 = arith.constant 0 : index
    %c0_1 = arith.constant 0 : index
    %3 = vector.load %arg3[%c0, %c0_1] : memref<16x8xbf16, #tpu.memory_space<vmem>>, vector<16x8xbf16>
    %4 = arith.extf %3 : vector<16x8xbf16> to vector<16x8xf32>
    %c0_2 = arith.constant 0 : index
    %c0_3 = arith.constant 0 : index
    %5 = vector.load %arg4[%c0_2, %c0_3] : memref<8x32xf32, #tpu.memory_space<vmem>>, vector<8x32xf32>
    %cst = arith.constant dense<0.000000e+00> : vector<16x32xf32>
    %6 = tpu.matmul %4, %5, %cst {dimension_numbers = #tpu.dot_dimension_numbers<[1], [0], [0], [1], [0, 0, 1, 1], [], []>} : vector<16x8xf32>, vector<8x32xf32>, vector<16x32xf32> -> vector<16x32xf32>
    %cst_4 = arith.constant dense<0.000000e+00> : vector<16xf32>
    %7 = vector.multi_reduction <add>, %6, %cst_4 [1] : vector<16x32xf32> to vector<16xf32>
    %8 = vector.shape_cast %7 : vector<16xf32> to vector<16x1xf32>
    %cst_5 = arith.constant 3.200000e+01 : f32
    %9 = vector.broadcast %cst_5 : f32 to vector<16x1xf32>
    %10 = arith.divf %8, %9 : vector<16x1xf32>
    %11 = vector.broadcast %10 : vector<16x1xf32> to vector<16x32xf32>
    %12 = arith.subf %6, %11 : vector<16x32xf32>
    %13 = arith.mulf %12, %12 : vector<16x32xf32>
    %cst_6 = arith.constant dense<0.000000e+00> : vector<16xf32>
    %14 = vector.multi_reduction <add>, %13, %cst_6 [1] : vector<16x32xf32> to vector<16xf32>
    %15 = vector.shape_cast %14 : vector<16xf32> to vector<16x1xf32>
    %cst_7 = arith.constant 3.200000e+01 : f32
    %16 = vector.broadcast %cst_7 : f32 to vector<16x1xf32>
    %17 = arith.divf %15, %16 : vector<16x1xf32>
    %18 = vector.broadcast %10 : vector<16x1xf32> to vector<16x32xf32>
    %19 = arith.subf %6, %18 : vector<16x32xf32>
    %cst_8 = arith.constant 9.99999974E-6 : f32
    %20 = vector.broadcast %cst_8 : f32 to vector<16x1xf32>
    %21 = arith.addf %17, %20 : vector<16x1xf32>
    %22 = math.rsqrt %21 : vector<16x1xf32>
    %23 = vector.broadcast %22 : vector<16x1xf32> to vector<16x32xf32>
    %24 = arith.mulf %19, %23 : vector<16x32xf32>
    %c0_9 = arith.constant 0 : index
    %c0_10 = arith.constant 0 : index
    %25 = vector.load %arg5[%c0_9, %c0_10] : memref<1x32xf32, #tpu.memory_space<vmem>>, vector<1x32xf32>
    %26 = vector.broadcast %25 : vector<1x32xf32> to vector<16x32xf32>
    %27 = arith.mulf %24, %26 : vector<16x32xf32>
    %c0_11 = arith.constant 0 : index
    %c0_12 = arith.constant 0 : index
    %28 = vector.load %arg6[%c0_11, %c0_12] : memref<1x32xf32, #tpu.memory_space<vmem>>, vector<1x32xf32>
    %29 = vector.broadcast %28 : vector<1x32xf32> to vector<16x32xf32>
    %30 = arith.addf %27, %29 : vector<16x32xf32>
    %c0_13 = arith.constant 0 : index
    %c0_14 = arith.constant 0 : index
    %31 = vector.load %arg7[%c0_13, %c0_14] : memref<32x32xf32, #tpu.memory_space<vmem>>, vector<32x32xf32>
    %cst_15 = arith.constant dense<0.000000e+00> : vector<16x32xf32>
    %32 = tpu.matmul %30, %31, %cst_15 {dimension_numbers = #tpu.dot_dimension_numbers<[1], [0], [0], [1], [0, 0, 1, 1], [], []>} : vector<16x32xf32>, vector<32x32xf32>, vector<16x32xf32> -> vector<16x32xf32>
    %33 = arith.addf %32, %30 : vector<16x32xf32>
    %cst_16 = arith.constant dense<0.000000e+00> : vector<16xf32>
    %34 = vector.multi_reduction <add>, %33, %cst_16 [1] : vector<16x32xf32> to vector<16xf32>
    %35 = vector.shape_cast %34 : vector<16xf32> to vector<16x1xf32>
    %cst_17 = arith.constant 3.200000e+01 : f32
    %36 = vector.broadcast %cst_17 : f32 to vector<16x1xf32>
    %37 = arith.divf %35, %36 : vector<16x1xf32>
    %38 = vector.broadcast %37 : vector<16x1xf32> to vector<16x32xf32>
    %39 = arith.subf %33, %38 : vector<16x32xf32>
    %40 = arith.mulf %39, %39 : vector<16x32xf32>
    %cst_18 = arith.constant dense<0.000000e+00> : vector<16xf32>
    %41 = vector.multi_reduction <add>, %40, %cst_18 [1] : vector<16x32xf32> to vector<16xf32>
    %42 = vector.shape_cast %41 : vector<16xf32> to vector<16x1xf32>
    %cst_19 = arith.constant 3.200000e+01 : f32
    %43 = vector.broadcast %cst_19 : f32 to vector<16x1xf32>
    %44 = arith.divf %42, %43 : vector<16x1xf32>
    %45 = vector.broadcast %37 : vector<16x1xf32> to vector<16x32xf32>
    %46 = arith.subf %33, %45 : vector<16x32xf32>
    %cst_20 = arith.constant 9.99999974E-6 : f32
    %47 = vector.broadcast %cst_20 : f32 to vector<16x1xf32>
    %48 = arith.addf %44, %47 : vector<16x1xf32>
    %49 = math.rsqrt %48 : vector<16x1xf32>
    %50 = vector.broadcast %49 : vector<16x1xf32> to vector<16x32xf32>
    %51 = arith.mulf %46, %50 : vector<16x32xf32>
    %c0_21 = arith.constant 0 : index
    %c0_22 = arith.constant 0 : index
    %52 = vector.load %arg8[%c0_21, %c0_22] : memref<1x32xf32, #tpu.memory_space<vmem>>, vector<1x32xf32>
    %53 = vector.broadcast %52 : vector<1x32xf32> to vector<16x32xf32>
    %54 = arith.mulf %51, %53 : vector<16x32xf32>
    %c0_23 = arith.constant 0 : index
    %c0_24 = arith.constant 0 : index
    %55 = vector.load %arg9[%c0_23, %c0_24] : memref<1x32xf32, #tpu.memory_space<vmem>>, vector<1x32xf32>
    %56 = vector.broadcast %55 : vector<1x32xf32> to vector<16x32xf32>
    %57 = arith.addf %54, %56 : vector<16x32xf32>
    %c1_i32 = arith.constant 1 : i32
    %58 = arith.muli %arg0, %c1_i32 : i32
    %59 = arith.addi %58, %arg1 : i32
    %c16_i32 = arith.constant 16 : i32
    %60 = arith.muli %59, %c16_i32 : i32
    %c0_25 = arith.constant 0 : index
    %61 = memref.load %arg2[%c0_25] : memref<1xi32, #tpu.memory_space<smem>>
    %c16_i32_26 = arith.constant 16 : i32
    %62 = arith.addi %60, %c16_i32_26 : i32
    %63 = arith.cmpi sle, %62, %61 : i32
    %64 = arith.extui %63 : i1 to i32
    %c0_i32_27 = arith.constant 0 : i32
    %65 = arith.cmpi ne, %64, %c0_i32_27 : i32
    scf.if %65 {
      %c0_30 = arith.constant 0 : index
      %c0_31 = arith.constant 0 : index
      %70 = vector.load %arg10[%c0_30, %c0_31] : memref<8x32xf32, #tpu.memory_space<vmem>>, vector<8x32xf32>
      %71 = vector.extract_strided_slice %57 {offsets = [0, 0], sizes = [8, 32], strides = [1, 1]} : vector<16x32xf32> to vector<8x32xf32>
      %72 = vector.extract_strided_slice %57 {offsets = [8, 0], sizes = [8, 32], strides = [1, 1]} : vector<16x32xf32> to vector<8x32xf32>
      %73 = arith.addf %71, %72 : vector<8x32xf32>
      %74 = arith.addf %70, %73 : vector<8x32xf32>
      %c0_32 = arith.constant 0 : index
      %c0_33 = arith.constant 0 : index
      %75 = vector.load %arg10[%c0_32, %c0_33] : memref<8x32xf32, #tpu.memory_space<vmem>>, vector<8x32xf32>
      tpu.vector_store %arg10[%c0_32, %c0_33], %74 {strides = array<i32>} : memref<8x32xf32, #tpu.memory_space<vmem>>, vector<8x32xf32>,
    } else {
    }
    %c16_i32_28 = arith.constant 16 : i32
    %66 = arith.addi %60, %c16_i32_28 : i32
    %67 = arith.cmpi sgt, %66, %61 : i32
    %68 = arith.extui %67 : i1 to i32
    %c0_i32_29 = arith.constant 0 : i32
    %69 = arith.cmpi ne, %68, %c0_i32_29 : i32
    scf.if %69 {
      %70 = tpu.iota {dimensions = array<i32: 0>} : vector<16x1xi32>
      %71 = vector.broadcast %60 : i32 to vector<16x1xi32>
      %72 = arith.addi %70, %71 : vector<16x1xi32>
      %73 = vector.broadcast %61 : i32 to vector<16x1xi32>
      %74 = arith.cmpi slt, %72, %73 : vector<16x1xi32>
      %cst_30 = arith.constant 0.000000e+00 : f32
      %75 = vector.shape_cast %74 : vector<16x1xi1> to vector<16x1xi1>
      %76 = vector.broadcast %75 : vector<16x1xi1> to vector<16x32xi1>
      %77 = vector.broadcast %cst_30 : f32 to vector<16x32xf32>
      %78 = arith.select %76, %57, %77 : vector<16x32xi1>, vector<16x32xf32>
      %c0_31 = arith.constant 0 : index
      %c0_32 = arith.constant 0 : index
      %79 = vector.load %arg10[%c0_31, %c0_32] : memref<8x32xf32, #tpu.memory_space<vmem>>, vector<8x32xf32>
      %80 = vector.extract_strided_slice %78 {offsets = [0, 0], sizes = [8, 32], strides = [1, 1]} : vector<16x32xf32> to vector<8x32xf32>
      %81 = vector.extract_strided_slice %78 {offsets = [8, 0], sizes = [8, 32], strides = [1, 1]} : vector<16x32xf32> to vector<8x32xf32>
      %82 = arith.addf %80, %81 : vector<8x32xf32>
      %83 = arith.addf %79, %82 : vector<8x32xf32>
      %c0_33 = arith.constant 0 : index
      %c0_34 = arith.constant 0 : index
      %84 = vector.load %arg10[%c0_33, %c0_34] : memref<8x32xf32, #tpu.memory_space<vmem>>, vector<8x32xf32>
      tpu.vector_store %arg10[%c0_33, %c0_34], %83 {strides = array<i32>} : memref<8x32xf32, #tpu.memory_space<vmem>>, vector<8x32xf32>,
    } else {
    }
    return
  }
  func.func @transform_0(%arg0: i32, %arg1: i32, %arg2: memref<1xi32, #tpu.memory_space<smem>>) -> (i32, i32) {
    %c1_i32 = arith.constant 1 : i32
    %0 = arith.muli %arg0, %c1_i32 : i32
    %1 = arith.addi %0, %arg1 : i32
    %c1_i32_0 = arith.constant 1 : i32
    %2 = arith.minsi %1, %c1_i32_0 : i32
    %c0_i32 = arith.constant 0 : i32
    %c0_i32_1 = arith.constant 0 : i32
    return %2, %c0_i32 : i32, i32
  }
  func.func @transform_1(%arg0: i32, %arg1: i32, %arg2: memref<1xi32, #tpu.memory_space<smem>>) -> (i32, i32) {
    %c0_i32 = arith.constant 0 : i32
    %c0_i32_0 = arith.constant 0 : i32
    %c0_i32_1 = arith.constant 0 : i32
    return %c0_i32, %c0_i32_0 : i32, i32
  }
  func.func @transform_2(%arg0: i32, %arg1: i32, %arg2: memref<1xi32, #tpu.memory_space<smem>>) -> (i32, i32) {
    %c0_i32 = arith.constant 0 : i32
    %c0_i32_0 = arith.constant 0 : i32
    %c0_i32_1 = arith.constant 0 : i32
    return %c0_i32, %c0_i32_0 : i32, i32
  }
  func.func @transform_3(%arg0: i32, %arg1: i32, %arg2: memref<1xi32, #tpu.memory_space<smem>>) -> (i32, i32) {
    %c0_i32 = arith.constant 0 : i32
    %c0_i32_0 = arith.constant 0 : i32
    %c0_i32_1 = arith.constant 0 : i32
    return %c0_i32, %c0_i32_0 : i32, i32
  }
  func.func @transform_4(%arg0: i32, %arg1: i32, %arg2: memref<1xi32, #tpu.memory_space<smem>>) -> (i32, i32) {
    %c0_i32 = arith.constant 0 : i32
    %c0_i32_0 = arith.constant 0 : i32
    %c0_i32_1 = arith.constant 0 : i32
    return %c0_i32, %c0_i32_0 : i32, i32
  }
  func.func @transform_5(%arg0: i32, %arg1: i32, %arg2: memref<1xi32, #tpu.memory_space<smem>>) -> (i32, i32) {
    %c0_i32 = arith.constant 0 : i32
    %c0_i32_0 = arith.constant 0 : i32
    %c0_i32_1 = arith.constant 0 : i32
    return %c0_i32, %c0_i32_0 : i32, i32
  }
  func.func @transform_6(%arg0: i32, %arg1: i32, %arg2: memref<1xi32, #tpu.memory_space<smem>>) -> (i32, i32) {
    %c0_i32 = arith.constant 0 : i32
    %c0_i32_0 = arith.constant 0 : i32
    %c0_i32_1 = arith.constant 0 : i32
    return %c0_i32, %c0_i32_0 : i32, i32
  }
  func.func @transform_7(%arg0: i32, %arg1: i32, %arg2: memref<1xi32, #tpu.memory_space<smem>>) -> (i32, i32) {
    %c0_i32 = arith.constant 0 : i32
    %c0_i32_0 = arith.constant 0 : i32
    return %arg0, %c0_i32 : i32, i32
  }
}

</mosaic_0001>

<llo_original>
// kernel: megan_forward.3
$region0: #{megan_forward.3}
  #allocation0 [shape = 'u32[]', space=smem, size = 0x4, offset = 0x4, fixed_abs, tag = 'smem constant byte address 0x4 - core index']
  #allocation1 [shape = 'u32[72,128]{1,0:T(1,128)}', space=vmem, size = 0x9000, scoped, tag = 'internal scratch']
  #allocation2 [shape = 'f32[1,1]{1,0:T(1,128)S(1)}', space=vmem, size = 0x200, scoped, tag = 'scoped memory for megan_forward.3']
  %s0 = inlined_call_operand.vmem [shape: f32[16,32], index: 0, kind: input, shape index: {}]
  %s1 = inlined_call_operand.vmem [shape: f32[32,16], index: 1, kind: input, shape index: {}]
  %s2 = inlined_call_operand.vmem [shape: f32[1,16], index: 2, kind: input, shape index: {}]
  %s3 = inlined_call_operand.vmem [shape: f32[16,1], index: 3, kind: input, shape index: {}]
  %s4 = inlined_call_operand.<no memory space> [shape: f32[1,1], index: 4, kind: input, shape index: {}]
  %s5 = inlined_call_operand.hbm [shape: f32[1,1], index: 5, kind: output, shape index: {}]
  %s6 = sld [smem:[#allocation0]]
  $region30: #{megan_forward.3} parent=0
    _
  %s8 = ssub.s32 1, %s6
  %s9 = scalar_select 0, %s8, %s6
  %v10 = vstv %s4
  %11 = vst [vmem:[#allocation2] sm:$0x1] %v10
  $region1: #{megan_forward.3} parent=0
    #allocation3 [shape = 'u8[512]{0}', space=vmem, size = 0x400, scoped, tag = 'output window, operand 0, single buffered']
    #allocation4 [shape = 's32[1]{0}', space=sflag, size = 0x4, scoped, tag = 'scoped memory for megan_forward.3']
    %12 = vsyncpa [#allocation4], 0
    // Predicated region
    $region2: #{megan_forward.3} parent=1 // pred_check
      _
    $region3: #{megan_forward.3} parent=1 // pred_check_branch
      %14 = sbr.rel (0) target = $region5
    $region4: #{megan_forward.3} parent=1 // pred_region
      _
    $region5: #{megan_forward.3} parent=1 // pred_fallthru
      _
    // Predicated region
    $region6: #{megan_forward.3} parent=1 // pred_check
      _
    $region7: #{megan_forward.3} parent=1 // pred_check_branch
      %16 = sbr.rel (0) target = $region9
    $region8: #{megan_forward.3} parent=1 // pred_region
      _
    $region9: #{megan_forward.3} parent=1 // pred_fallthru
      _
    // Predicated region
    $region10: #{megan_forward.3} parent=1 // pred_check
      _
    $region11: #{megan_forward.3} parent=1 // pred_check_branch
      %18 = sbr.rel (0) target = $region13
    $region12: #{megan_forward.3} parent=1 // pred_region
      _
    $region13: #{megan_forward.3} parent=1 // pred_fallthru
      _
    // Predicated region
    $region14: #{megan_forward.3} parent=1 // pred_check
      _
    $region15: #{megan_forward.3} parent=1 // pred_check_branch
      %20 = sbr.rel (0) target = $region17
    $region16: #{megan_forward.3} parent=1 // pred_region
      _
    $region17: #{megan_forward.3} parent=1 // pred_fallthru
      _
    // Predicated region
    $region18: #{megan_forward.3} parent=1 // pred_check
      _
    $region19: #{megan_forward.3} parent=1 // pred_check_branch
      %22 = sbr.rel (0) target = $region21
    $region20: #{megan_forward.3} parent=1 // pred_region
      _
    $region21: #{megan_forward.3} parent=1 // pred_fallthru
      _
    %v23 = vld [vmem:[%s0] sm:$0xff]
    %v24 = vld [vmem:[%s0 + $0x8] sm:$0xff]
    %vm25 = vcmask 261120
    %v26 = vsel %vm25, %v23, 0.0
    %v27 = vsel %vm25, %v24, 0.0
    %v28 = vadd.f32 %v26, %v27
    %v29 = vrot.slane %v28, 4
    %v30 = vadd.f32 %v28, %v29
    %v31 = vrot.slane %v30, 2
    %v32 = vadd.f32 %v30, %v31
    %v33 = vrot.slane %v32, 1
    %v34 = vadd.f32 %v32, %v33
    %v35 = vld [vmem:[%s1] sm:$0xff]
    %v36 = vld [vmem:[%s1 + $0x8] sm:$0xff]
    %v37 = vld [vmem:[%s1 + $0x10] sm:$0xff]
    %v38 = vld [vmem:[%s1 + $0x18] sm:$0xff]
    %v39 = vld [vmem:[%s2] sm:$0x1]
    %v41 = vsel %vm25, %v34, 0
    %43 = vmatpush.msra.mxu0 0.0
    %44 = vmatpush.msra.mxu0 0.0
    %45 = vmatpush.msra.mxu0 0.0
    %46 = vmatpush.msra.mxu0 0.0
    %47 = vmatpush.msra.mxu0 0.0
    %48 = vmatpush.msra.mxu0 0.0
    %49 = vmatpush.msra.mxu0 0.0
    %50 = vmatpush.msra.mxu0 0.0
    %51 = vmatpush.msra.mxu0 0.0
    %52 = vmatpush.msra.mxu0 0.0
    %53 = vmatpush.msra.mxu0 0.0
    %54 = vmatpush.msra.mxu0 0.0
    %55 = vmatpush.msra.mxu0 %v38
    %56 = vmatpush.msra.mxu0 %v37
    %57 = vmatpush.msra.mxu0 %v36
    %58 = vmatpush.msra.mxu0 %v35
    %59 = vmatmul.f32.gmra.mxu0 %v41
    %v60 = vpop.f32.mrf.mxu0
    %v61 = vadd.f32 %v39, %v60
    %62 = vdwg.mxu0
    %v63 = vmax.f32 %v61, 0.0
    %v64 = vld [vmem:[%s3] sm:$0xff]
    %v65 = vld [vmem:[%s3 + $0x8] sm:$0xff]
    %v66 = vld [vmem:[#allocation2] sm:$0x1]
    %vm67 = vcmask 130048
    %v69 = vsel %vm67, %v63, 0
    %71 = vmatpush.msra.mxu0 0.0
    %72 = vmatpush.msra.mxu0 0.0
    %73 = vmatpush.msra.mxu0 0.0
    %74 = vmatpush.msra.mxu0 0.0
    %75 = vmatpush.msra.mxu0 0.0
    %76 = vmatpush.msra.mxu0 0.0
    %77 = vmatpush.msra.mxu0 0.0
    %78 = vmatpush.msra.mxu0 0.0
    %79 = vmatpush.msra.mxu0 0.0
    %80 = vmatpush.msra.mxu0 0.0
    %81 = vmatpush.msra.mxu0 0.0
    %82 = vmatpush.msra.mxu0 0.0
    %83 = vmatpush.msra.mxu0 0.0
    %84 = vmatpush.msra.mxu0 0.0
    %85 = vmatpush.msra.mxu0 %v65
    %86 = vmatpush.msra.mxu0 %v64
    %87 = vmatmul.f32.gmra.mxu0 %v69
    %v88 = vpop.f32.mrf.mxu0
    %v89 = vadd.f32 %v66, %v88
    %90 = vdwg.mxu0
    %vm91 = vcmask 0
    %92 = vst.msk [vmem:[#allocation3] sm:$0x1] %vm91, %v89
    // Predicated region
    $region22: #{megan_forward.3} parent=1 // pred_check
      _
    $region23: #{megan_forward.3} parent=1 // pred_check_branch
      %94 = sbr.rel (0) target = $region25
    $region24: #{megan_forward.3} parent=1 // pred_region
      %96 = vsyncadd [#allocation4], 0
      %s98 = sshll.u32 [#allocation3], 4
      %s99 = int_to_ptr.vmem [resolvable:$true] %s98
      %s100 = sshll.u32 %s5, 4
      %s101 = int_to_ptr.hbm [resolvable:$true] %s100
      %103 = dma.vmem_to_hbm [thread:$0]  %s99, 16, %s101, [#allocation4]
    $region25: #{megan_forward.3} parent=1 // pred_fallthru
      _
    // Predicated region
    $region26: #{megan_forward.3} parent=1 // pred_check
      _
    $region27: #{megan_forward.3} parent=1 // pred_check_branch
      %105 = sbr.rel (0) target = $region29
    $region28: #{megan_forward.3} parent=1 // pred_region
      %107 = dma.done [#allocation4], 16
    $region29: #{megan_forward.3} parent=1 // pred_fallthru
      _
    %108 = vsyncpa [#allocation4], 1

// kernel: megan_forward.2
$region0: #{megan_forward.2}
  #allocation0 [shape = 'u32[]', space=smem, size = 0x4, offset = 0x4, fixed_abs, tag = 'smem constant byte address 0x4 - core index']
  #allocation1 [shape = 'u32[72,128]{1,0:T(1,128)}', space=vmem, size = 0x9000, scoped, tag = 'internal scratch']
  #allocation2 [shape = 's32[1]{0}', space=sflag, size = 0x4, scoped, tag = 'scoped memory for megan_forward.2']
  #allocation3 [shape = 's32[1]{0:T(128)S(6)}', space=smem, size = 0x200, scoped, tag = 'prefetched SMEM operand 0']
  %s0 = inlined_call_operand.<no memory space> [shape: s32[1], index: 0, kind: input, shape index: {}]
  %s1 = inlined_call_operand.vmem [shape: bf16[29,8], index: 1, kind: input, shape index: {}]
  %s2 = inlined_call_operand.vmem [shape: f32[8,32], index: 2, kind: input, shape index: {}]
  %s3 = inlined_call_operand.vmem [shape: f32[1,32], index: 3, kind: input, shape index: {}]
  %s4 = inlined_call_operand.vmem [shape: f32[1,32], index: 4, kind: input, shape index: {}]
  %s5 = inlined_call_operand.vmem [shape: f32[32,32], index: 5, kind: input, shape index: {}]
  %s6 = inlined_call_operand.vmem [shape: f32[1,32], index: 6, kind: input, shape index: {}]
  %s7 = inlined_call_operand.vmem [shape: f32[1,32], index: 7, kind: input, shape index: {}]
  %s8 = inlined_call_operand.vmem [shape: f32[16,32], index: 8, kind: output, shape index: {}]
  %s9 = sld [smem:[#allocation0]]
  $region73: #{megan_forward.2} parent=0
    _
  %s11 = ssub.s32 1, %s9
  %s12 = scalar_select 0, %s11, %s9
  %13 = sst [smem:[#allocation3]] %s0
  loop: start=0, step=1, limit=4
  $region2: #{megan_forward.2} parent=0 // loop_pre_header
    _
  $region3: #{megan_forward.2} parent=0 // loop_header
    %s15 = sphi 0, %s19
    %p16 = scmp.ge.s32.totalorder %s15, 4
    %s22 = sphi 0, %s34
    %s23 = sphi 0, %s30
    %s24 = sphi 0, %s22
    %s25 = sphi 0, %s23
    %s26 = sphi 0, %s24
    %s27 = sphi 0, %s25
    %s43 = sphi 0, %s45
    %s46 = sphi 0, %s43
    %s47 = sphi 0, %s46
    %s63 = sphi 0, %s47
    %s67 = sphi 0, %s67
    %s69 = sphi 0, %s67
    %s70 = sphi 0, %s69
    %s84 = sphi 0, %s70
    %s88 = sphi 0, %s88
    %s90 = sphi 0, %s88
    %s91 = sphi 0, %s90
    %s105 = sphi 0, %s91
    %s109 = sphi 0, %s109
    %s111 = sphi 0, %s109
    %s112 = sphi 0, %s111
    %s126 = sphi 0, %s112
    %s130 = sphi 0, %s130
    %s132 = sphi 0, %s130
    %s133 = sphi 0, %s132
    %s147 = sphi 0, %s133
    %s151 = sphi 0, %s151
    %s153 = sphi 0, %s151
    %s154 = sphi 0, %s153
    %s168 = sphi 0, %s154
    %s172 = sphi 0, %s172
    %s174 = sphi 0, %s172
    %s175 = sphi 0, %s174
    %s189 = sphi 0, %s175
    %s195 = sphi 0, %s197
    %s198 = sphi 0, %s195
    %s199 = sphi 0, %s198
    %s215 = sphi 0, %s199
  $region4: #{megan_forward.2} parent=0 // loop_header_branch
    %18 = sbr.rel (%p16) target = $region8
  $region5: #{megan_forward.2} parent=0 // loop_body
    %s20 = ssub.s32 %s15, 1
    %s21 = ssub.s32 %s15, 2
    %s28 = sadd.s32 1, %s23
    %p29 = scmp.ge.s32.totalorder %s28, 1
    %s30 = scalar_select %p29, 0, %s28
    %s31 = sadd.s32 1, %s22
    %s32 = scalar_select %p29, %s31, %s22
    %p33 = scmp.ge.s32.totalorder %s32, 2
    %s34 = scalar_select %p33, 0, %s32
    %s35 = sadd.s32 %s22, %s23
    %p36 = scmp.lt.s32.totalorder %s35, 1
    %s37 = scalar_select %p36, %s35, 1
    %s38 = sadd.s32 %s34, %s30
    %p39 = scmp.lt.s32.totalorder %s38, 1
    %s40 = scalar_select %p39, %s38, 1
    %s41 = ssub.s32 %s37, %s40
    %p42 = scmp.eq.s32.totalorder %s41, 0
    %s44 = sadd.s32 %s43, 1
    %s45 = scalar_select %p42, %s43, %s44
    %p48 = pneg %p42
    %p49 = scmp.eq.s32.totalorder %s15, 1
    %p50 = por %p48, %p49
    %p51 = scmp.ne.s32.totalorder %s43, %s46
    %p52 = scmp.eq.s32.totalorder %s15, 0
    %p53 = por %p51, %p52
    %p54 = scmp.ne.s32.totalorder %s43, %s46
    %p55 = scmp.eq.s32.totalorder %s20, 1
    %p56 = por %p54, %p55
    %p57 = scmp.ne.s32.totalorder %s46, %s47
    %p58 = scmp.eq.s32.totalorder %s20, 0
    %p59 = por %p57, %p58
    %p60 = scmp.ne.s32.totalorder %s46, %s47
    %p61 = scmp.eq.s32.totalorder %s21, 1
    %p62 = por %p60, %p61
    %p64 = scmp.ne.s32.totalorder %s47, %s63
    %p65 = scmp.eq.s32.totalorder %s21, 0
    %p66 = por %p64, %p65
    %s68 = sadd.s32 %s67, 1
    %p71 = scmp.eq.s32.totalorder %s15, 1
    %p72 = scmp.ne.s32.totalorder %s67, %s69
    %p73 = scmp.eq.s32.totalorder %s15, 0
    %p74 = por %p72, %p73
    %p75 = scmp.ne.s32.totalorder %s67, %s69
    %p76 = scmp.eq.s32.totalorder %s20, 1
    %p77 = por %p75, %p76
    %p78 = scmp.ne.s32.totalorder %s69, %s70
    %p79 = scmp.eq.s32.totalorder %s20, 0
    %p80 = por %p78, %p79
    %p81 = scmp.ne.s32.totalorder %s69, %s70
    %p82 = scmp.eq.s32.totalorder %s21, 1
    %p83 = por %p81, %p82
    %p85 = scmp.ne.s32.totalorder %s70, %s84
    %p86 = scmp.eq.s32.totalorder %s21, 0
    %p87 = por %p85, %p86
    %s89 = sadd.s32 %s88, 1
    %p92 = scmp.eq.s32.totalorder %s15, 1
    %p93 = scmp.ne.s32.totalorder %s88, %s90
    %p94 = scmp.eq.s32.totalorder %s15, 0
    %p95 = por %p93, %p94
    %p96 = scmp.ne.s32.totalorder %s88, %s90
    %p97 = scmp.eq.s32.totalorder %s20, 1
    %p98 = por %p96, %p97
    %p99 = scmp.ne.s32.totalorder %s90, %s91
    %p100 = scmp.eq.s32.totalorder %s20, 0
    %p101 = por %p99, %p100
    %p102 = scmp.ne.s32.totalorder %s90, %s91
    %p103 = scmp.eq.s32.totalorder %s21, 1
    %p104 = por %p102, %p103
    %p106 = scmp.ne.s32.totalorder %s91, %s105
    %p107 = scmp.eq.s32.totalorder %s21, 0
    %p108 = por %p106, %p107
    %s110 = sadd.s32 %s109, 1
    %p113 = scmp.eq.s32.totalorder %s15, 1
    %p114 = scmp.ne.s32.totalorder %s109, %s111
    %p115 = scmp.eq.s32.totalorder %s15, 0
    %p116 = por %p114, %p115
    %p117 = scmp.ne.s32.totalorder %s109, %s111
    %p118 = scmp.eq.s32.totalorder %s20, 1
    %p119 = por %p117, %p118
    %p120 = scmp.ne.s32.totalorder %s111, %s112
    %p121 = scmp.eq.s32.totalorder %s20, 0
    %p122 = por %p120, %p121
    %p123 = scmp.ne.s32.totalorder %s111, %s112
    %p124 = scmp.eq.s32.totalorder %s21, 1
    %p125 = por %p123, %p124
    %p127 = scmp.ne.s32.totalorder %s112, %s126
    %p128 = scmp.eq.s32.totalorder %s21, 0
    %p129 = por %p127, %p128
    %s131 = sadd.s32 %s130, 1
    %p134 = scmp.eq.s32.totalorder %s15, 1
    %p135 = scmp.ne.s32.totalorder %s130, %s132
    %p136 = scmp.eq.s32.totalorder %s15, 0
    %p137 = por %p135, %p136
    %p138 = scmp.ne.s32.totalorder %s130, %s132
    %p139 = scmp.eq.s32.totalorder %s20, 1
    %p140 = por %p138, %p139
    %p141 = scmp.ne.s32.totalorder %s132, %s133
    %p142 = scmp.eq.s32.totalorder %s20, 0
    %p143 = por %p141, %p142
    %p144 = scmp.ne.s32.totalorder %s132, %s133
    %p145 = scmp.eq.s32.totalorder %s21, 1
    %p146 = por %p144, %p145
    %p148 = scmp.ne.s32.totalorder %s133, %s147
    %p149 = scmp.eq.s32.totalorder %s21, 0
    %p150 = por %p148, %p149
    %s152 = sadd.s32 %s151, 1
    %p155 = scmp.eq.s32.totalorder %s15, 1
    %p156 = scmp.ne.s32.totalorder %s151, %s153
    %p157 = scmp.eq.s32.totalorder %s15, 0
    %p158 = por %p156, %p157
    %p159 = scmp.ne.s32.totalorder %s151, %s153
    %p160 = scmp.eq.s32.totalorder %s20, 1
    %p161 = por %p159, %p160
    %p162 = scmp.ne.s32.totalorder %s153, %s154
    %p163 = scmp.eq.s32.totalorder %s20, 0
    %p164 = por %p162, %p163
    %p165 = scmp.ne.s32.totalorder %s153, %s154
    %p166 = scmp.eq.s32.totalorder %s21, 1
    %p167 = por %p165, %p166
    %p169 = scmp.ne.s32.totalorder %s154, %s168
    %p170 = scmp.eq.s32.totalorder %s21, 0
    %p171 = por %p169, %p170
    %s173 = sadd.s32 %s172, 1
    %p176 = scmp.eq.s32.totalorder %s15, 1
    %p177 = scmp.ne.s32.totalorder %s172, %s174
    %p178 = scmp.eq.s32.totalorder %s15, 0
    %p179 = por %p177, %p178
    %p180 = scmp.ne.s32.totalorder %s172, %s174
    %p181 = scmp.eq.s32.totalorder %s20, 1
    %p182 = por %p180, %p181
    %p183 = scmp.ne.s32.totalorder %s174, %s175
    %p184 = scmp.eq.s32.totalorder %s20, 0
    %p185 = por %p183, %p184
    %p186 = scmp.ne.s32.totalorder %s174, %s175
    %p187 = scmp.eq.s32.totalorder %s21, 1
    %p188 = por %p186, %p187
    %p190 = scmp.ne.s32.totalorder %s175, %s189
    %p191 = scmp.eq.s32.totalorder %s21, 0
    %p192 = por %p190, %p191
    %s193 = ssub.s32 %s22, %s34
    %p194 = scmp.eq.s32.totalorder %s193, 0
    %s196 = sadd.s32 %s195, 1
    %s197 = scalar_select %p194, %s195, %s196
    %p200 = pneg %p194
    %p201 = scmp.eq.s32.totalorder %s15, 1
    %p202 = por %p200, %p201
    %p203 = scmp.ne.s32.totalorder %s195, %s198
    %p204 = scmp.eq.s32.totalorder %s15, 0
    %p205 = por %p203, %p204
    %p206 = scmp.ne.s32.totalorder %s195, %s198
    %p207 = scmp.eq.s32.totalorder %s20, 1
    %p208 = por %p206, %p207
    %p209 = scmp.ne.s32.totalorder %s198, %s199
    %p210 = scmp.eq.s32.totalorder %s20, 0
    %p211 = por %p209, %p210
    %p212 = scmp.ne.s32.totalorder %s198, %s199
    %p213 = scmp.eq.s32.totalorder %s21, 1
    %p214 = por %p212, %p213
    %p216 = scmp.ne.s32.totalorder %s199, %s215
    %p217 = scmp.eq.s32.totalorder %s21, 0
    %p218 = por %p216, %p217
    %p219 = scmp.le.s32.totalorder 1, %s15
    %p220 = scmp.lt.s32.totalorder %s15, 3
    %p221 = pnand %p219, %p220
    %p222 = pneg %p221
    // Predicated region
    $region9: #{megan_forward.2} parent=5 // pred_check
      _
    $region10: #{megan_forward.2} parent=5 // pred_check_branch
      %224 = sbr.rel (%p221) target = $region12
    $region11: #{megan_forward.2} parent=5 // pred_region
      %s225 = ssub.s32 %s15, 1
      // Predicated region
      $region13: #{megan_forward.2} parent=11 // pred_check
        %p226 = pneg %p80
      $region14: #{megan_forward.2} parent=11 // pred_check_branch
        %228 = sbr.rel (%p226) target = $region16
      $region15: #{megan_forward.2} parent=11 // pred_region
        _
      $region16: #{megan_forward.2} parent=11 // pred_fallthru
        _
      // Predicated region
      $region17: #{megan_forward.2} parent=11 // pred_check
        %p229 = pneg %p101
      $region18: #{megan_forward.2} parent=11 // pred_check_branch
        %231 = sbr.rel (%p229) target = $region20
      $region19: #{megan_forward.2} parent=11 // pred_region
        _
      $region20: #{megan_forward.2} parent=11 // pred_fallthru
        _
      // Predicated region
      $region21: #{megan_forward.2} parent=11 // pred_check
        %p232 = pneg %p122
      $region22: #{megan_forward.2} parent=11 // pred_check_branch
        %234 = sbr.rel (%p232) target = $region24
      $region23: #{megan_forward.2} parent=11 // pred_region
        _
      $region24: #{megan_forward.2} parent=11 // pred_fallthru
        _
      // Predicated region
      $region25: #{megan_forward.2} parent=11 // pred_check
        %p235 = pneg %p143
      $region26: #{megan_forward.2} parent=11 // pred_check_branch
        %237 = sbr.rel (%p235) target = $region28
      $region27: #{megan_forward.2} parent=11 // pred_region
        _
      $region28: #{megan_forward.2} parent=11 // pred_fallthru
        _
      // Predicated region
      $region29: #{megan_forward.2} parent=11 // pred_check
        %p238 = pneg %p164
      $region30: #{megan_forward.2} parent=11 // pred_check_branch
        %240 = sbr.rel (%p238) target = $region32
      $region31: #{megan_forward.2} parent=11 // pred_region
        _
      $region32: #{megan_forward.2} parent=11 // pred_fallthru
        _
      // Predicated region
      $region33: #{megan_forward.2} parent=11 // pred_check
        %p241 = pneg %p185
      $region34: #{megan_forward.2} parent=11 // pred_check_branch
        %243 = sbr.rel (%p241) target = $region36
      $region35: #{megan_forward.2} parent=11 // pred_region
        _
      $region36: #{megan_forward.2} parent=11 // pred_fallthru
        _
    $region12: #{megan_forward.2} parent=5 // pred_fallthru
      _
    %p244 = scmp.lt.s32.totalorder %s15, 2
    // Predicated region
    $region37: #{megan_forward.2} parent=5 // pred_check
      %p245 = pneg %p244
    $region38: #{megan_forward.2} parent=5 // pred_check_branch
      %247 = sbr.rel (%p245) target = $region40
    $region39: #{megan_forward.2} parent=5 // pred_region
      // Predicated region
      $region41: #{megan_forward.2} parent=39 // pred_check
        %p248 = pneg %p53
      $region42: #{megan_forward.2} parent=39 // pred_check_branch
        %250 = sbr.rel (%p248) target = $region44
      $region43: #{megan_forward.2} parent=39 // pred_region
        %s251 = sadd.s32 %s22, %s23
        %p252 = scmp.lt.s32.totalorder %s251, 1
        %s253 = scalar_select %p252, %s251, 1
        %s254 = smul.u32 2, %s253
        %p255 = scmp.lt.s32.totalorder %s254, 3
        %s256 = scalar_select %p255, %s254, 3
        %s257 = smul.addr %s256, 4
        %s258 = scalar_lea.vmem %s1, %s257
        %s259 = sadd.s32 %s22, %s23
        %p260 = scmp.lt.s32.totalorder %s259, 1
        %s261 = scalar_select %p260, %s259, 1
        %s262 = smul.u32 2, %s261
      $region44: #{megan_forward.2} parent=39 // pred_fallthru
        _
    $region40: #{megan_forward.2} parent=5 // pred_fallthru
      _
    %p263 = scmp.le.s32.totalorder 1, %s15
    %p264 = scmp.lt.s32.totalorder %s15, 3
    %p265 = pnand %p263, %p264
    %p266 = pneg %p265
    // Predicated region
    $region45: #{megan_forward.2} parent=5 // pred_check
      _
    $region46: #{megan_forward.2} parent=5 // pred_check_branch
      %268 = sbr.rel (%p265) target = $region48
    $region47: #{megan_forward.2} parent=5 // pred_region
      %s269 = ssub.s32 %s15, 1
      %s270 = sadd.s32 %s24, %s25
      %p271 = scmp.lt.s32.totalorder %s270, 1
      %s272 = scalar_select %p271, %s270, 1
      %s273 = smul.u32 2, %s272
      %p274 = scmp.lt.s32.totalorder %s273, 3
      %s275 = scalar_select %p274, %s273, 3
      %s276 = smul.addr %s275, 4
      %s277 = scalar_lea.vmem %s1, %s276
      %p278 = pneg %p59
      %p279 = pneg %p56
      %p280 = pneg %p80
      %p281 = pneg %p77
      %p282 = pneg %p101
      %p283 = pneg %p98
      %p284 = pneg %p122
      %p285 = pneg %p119
      %p286 = pneg %p143
      %p287 = pneg %p140
      %p288 = pneg %p164
      %p289 = pneg %p161
      %p290 = pneg %p185
      %p291 = pneg %p182
      %p292 = pneg %p211
      %p293 = pneg %p208
      %p294 = scmp.lt.s32.totalorder %s24, 1
      %s295 = scalar_select %p294, %s24, 1
      %s296 = smul.addr %s295, 8
      %s297 = scalar_lea.vmem %s8, %s296
      %s298 = sadd.s32 %s24, %s25
      %p299 = scmp.lt.s32.totalorder %s298, 1
      %s300 = scalar_select %p299, %s298, 1
      %s301 = smul.u32 2, %s300
      %p302 = scmp.lt.s32.totalorder %s301, 3
      %s303 = scalar_select %p302, %s301, 3
      %s304 = smul.addr %s303, 4
      %s305 = scalar_lea.vmem %s1, %s304
      %s306 = sadd.s32 %s24, %s25
      %p307 = scmp.lt.s32.totalorder %s306, 1
      %s308 = scalar_select %p307, %s306, 1
      %s309 = smul.u32 2, %s308
      %p310 = scmp.lt.s32.totalorder %s24, 1
      %s311 = scalar_select %p310, %s24, 1
      %s312 = smul.addr %s311, 8
      %s313 = scalar_lea.vmem %s8, %s312
      %p314 = scmp.eq.s32.totalorder %s25, 0
      // Predicated region
      $region49: #{megan_forward.2} parent=47 // pred_check
        %p315 = pneg %p314
      $region50: #{megan_forward.2} parent=47 // pred_check_branch
        %317 = sbr.rel (%p315) target = $region52
      $region51: #{megan_forward.2} parent=47 // pred_region
        %vm318 = vcmask 261120
        %319 = vst.msk [vmem:[%s313] sm:$0xff] %vm318, 0.0
      $region52: #{megan_forward.2} parent=47 // pred_fallthru
        _
      %v320 = vld [vmem:[%s305] sm:$0xf]
      %v321 = vld [vmem:[%s305 + $0x4] sm:$0xf]
      %v322 = vunpack.c.l.bf16 %v320
      %v323 = vunpack.c.l.bf16 %v321
      %v324 = vld [vmem:[%s2] sm:$0xff]
      %vm325 = vcmask 64512
      %v327 = vsel %vm325, %v322, 0
      %v330 = vsel %vm325, %v323, 0
      %332 = vmatpush.msra.mxu0 0.0
      %333 = vmatpush.msra.mxu0 0.0
      %334 = vmatpush.msra.mxu0 0.0
      %335 = vmatpush.msra.mxu0 0.0
      %336 = vmatpush.msra.mxu0 0.0
      %337 = vmatpush.msra.mxu0 0.0
      %338 = vmatpush.msra.mxu0 0.0
      %339 = vmatpush.msra.mxu0 0.0
      %340 = vmatpush.msra.mxu0 0.0
      %341 = vmatpush.msra.mxu0 0.0
      %342 = vmatpush.msra.mxu0 0.0
      %343 = vmatpush.msra.mxu0 0.0
      %344 = vmatpush.msra.mxu0 0.0
      %345 = vmatpush.msra.mxu0 0.0
      %346 = vmatpush.msra.mxu0 0.0
      %347 = vmatpush.msra.mxu0 %v324
      %348 = vmatmul.f32.gmra.mxu0 %v327
      %v349 = vpop.f32.mrf.mxu0
      %v350 = vadd.f32 0.0, %v349
      %351 = vmatmul.f32.gmra.mxu0 %v330
      %v352 = vpop.f32.mrf.mxu0
      %v353 = vadd.f32 0.0, %v352
      %354 = vdwg.mxu0
      %vm355 = vcmask 261120
      %v356 = vsel %vm355, %v350, 0.0
      %357 = vadd.xlane.f32.xlu0 %v356
      %v358 = vpop.xlane.xlu0 %357
      %v359 = vsel %vm355, %v353, 0.0
      %360 = vadd.xlane.f32.xlu0 %v359
      %v361 = vpop.xlane.xlu0 %360
      %v362 = vrcp.pop 32.0
      %v363 = vmul.f32 32.0, %v362
      %v364 = vsub.f32 1.0, %v363
      %v365 = vmul.f32 %v362, %v364
      %v366 = vadd.f32 %v362, %v365
      %vm367 = vweird.f32 %v362
      %v368 = vsel %vm367, %v362, %v366
      %v369 = vmul.f32 %v358, %v368
      %v370 = vmul.f32 %v361, %v368
      %v371 = vsub.f32 %v350, %v369
      %v372 = vsub.f32 %v353, %v370
      %v373 = vmul.f32 %v371, %v371
      %v374 = vmul.f32 %v372, %v372
      %v375 = vsel %vm355, %v373, 0.0
      %376 = vadd.xlane.f32.xlu0 %v375
      %v377 = vpop.xlane.xlu0 %376
      %v378 = vsel %vm355, %v374, 0.0
      %379 = vadd.xlane.f32.xlu0 %v378
      %v380 = vpop.xlane.xlu0 %379
      %v381 = vmul.f32 %v377, %v368
      %v382 = vmul.f32 %v380, %v368
      %v383 = vadd.f32 %v381, 1e-05
      %v384 = vadd.f32 %v382, 1e-05
      %v385 = vrsqrt.pop %v383
      %v386 = vmul.f32 %v385, %v383
      %v387 = vmul.f32 %v386, %v385
      %v388 = vmul.f32 0.5, %v387
      %v389 = vsub.f32 1.5, %v388
      %v390 = vmul.f32 %v385, %v389
      %vm391 = vweird.f32 %v383
      %vm392 = vweird.f32 %v385
      %vm393 = vmor %vm391, %vm392
      %v394 = vsel %vm393, %v385, %v390
      %v395 = vrsqrt.pop %v384
      %v396 = vmul.f32 %v395, %v384
      %v397 = vmul.f32 %v396, %v395
      %v398 = vmul.f32 0.5, %v397
      %v399 = vsub.f32 1.5, %v398
      %v400 = vmul.f32 %v395, %v399
      %vm401 = vweird.f32 %v384
      %vm402 = vweird.f32 %v395
      %vm403 = vmor %vm401, %vm402
      %v404 = vsel %vm403, %v395, %v400
      %v405 = vmul.f32 %v371, %v394
      %v406 = vmul.f32 %v372, %v404
      %v407 = vld [vmem:[%s3] sm:$0x1]
      %v409 = vperm.slane %v407, 0
      %v411 = vmul.f32 %v405, %v409
      %v412 = vmul.f32 %v406, %v409
      %v413 = vld [vmem:[%s4] sm:$0x1]
      %v415 = vperm.slane %v413, 0
      %v417 = vadd.f32 %v411, %v415
      %v418 = vadd.f32 %v412, %v415
      %v419 = vld [vmem:[%s5] sm:$0xff]
      %v420 = vld [vmem:[%s5 + $0x8] sm:$0xff]
      %v421 = vld [vmem:[%s5 + $0x10] sm:$0xff]
      %v422 = vld [vmem:[%s5 + $0x18] sm:$0xff]
      %v424 = vsel %vm355, %v417, 0
      %v427 = vsel %vm355, %v418, 0
      %429 = vmatpush.msra.mxu0 0.0
      %430 = vmatpush.msra.mxu0 0.0
      %431 = vmatpush.msra.mxu0 0.0
      %432 = vmatpush.msra.mxu0 0.0
      %433 = vmatpush.msra.mxu0 0.0
      %434 = vmatpush.msra.mxu0 0.0
      %435 = vmatpush.msra.mxu0 0.0
      %436 = vmatpush.msra.mxu0 0.0
      %437 = vmatpush.msra.mxu0 0.0
      %438 = vmatpush.msra.mxu0 0.0
      %439 = vmatpush.msra.mxu0 0.0
      %440 = vmatpush.msra.mxu0 0.0
      %441 = vmatpush.msra.mxu0 %v422
      %442 = vmatpush.msra.mxu0 %v421
      %443 = vmatpush.msra.mxu0 %v420
      %444 = vmatpush.msra.mxu0 %v419
      %445 = vmatmul.f32.gmra.mxu0 %v424
      %v446 = vpop.f32.mrf.mxu0
      %v447 = vadd.f32 %v417, %v446
      %448 = vmatmul.f32.gmra.mxu0 %v427
      %v449 = vpop.f32.mrf.mxu0
      %v450 = vadd.f32 %v418, %v449
      %451 = vdwg.mxu0
      %v452 = vsel %vm355, %v447, 0.0
      %453 = vadd.xlane.f32.xlu0 %v452
      %v454 = vpop.xlane.xlu0 %453
      %v455 = vsel %vm355, %v450, 0.0
      %456 = vadd.xlane.f32.xlu0 %v455
      %v457 = vpop.xlane.xlu0 %456
      %v458 = vmul.f32 %v454, %v368
      %v459 = vmul.f32 %v457, %v368
      %v460 = vsub.f32 %v447, %v458
      %v461 = vsub.f32 %v450, %v459
      %v462 = vmul.f32 %v460, %v460
      %v463 = vmul.f32 %v461, %v461
      %v464 = vsel %vm355, %v462, 0.0
      %465 = vadd.xlane.f32.xlu0 %v464
      %v466 = vpop.xlane.xlu0 %465
      %v467 = vsel %vm355, %v463, 0.0
      %468 = vadd.xlane.f32.xlu0 %v467
      %v469 = vpop.xlane.xlu0 %468
      %v470 = vmul.f32 %v466, %v368
      %v471 = vmul.f32 %v469, %v368
      %v472 = vadd.f32 %v470, 1e-05
      %v473 = vadd.f32 %v471, 1e-05
      %v474 = vrsqrt.pop %v472
      %v475 = vmul.f32 %v474, %v472
      %v476 = vmul.f32 %v475, %v474
      %v477 = vmul.f32 0.5, %v476
      %v478 = vsub.f32 1.5, %v477
      %v479 = vmul.f32 %v474, %v478
      %vm480 = vweird.f32 %v472
      %vm481 = vweird.f32 %v474
      %vm482 = vmor %vm480, %vm481
      %v483 = vsel %vm482, %v474, %v479
      %v484 = vrsqrt.pop %v473
      %v485 = vmul.f32 %v484, %v473
      %v486 = vmul.f32 %v485, %v484
      %v487 = vmul.f32 0.5, %v486
      %v488 = vsub.f32 1.5, %v487
      %v489 = vmul.f32 %v484, %v488
      %vm490 = vweird.f32 %v473
      %vm491 = vweird.f32 %v484
      %vm492 = vmor %vm490, %vm491
      %v493 = vsel %vm492, %v484, %v489
      %v494 = vmul.f32 %v460, %v483
      %v495 = vmul.f32 %v461, %v493
      %v496 = vld [vmem:[%s6] sm:$0x1]
      %v498 = vperm.slane %v496, 0
      %v500 = vmul.f32 %v494, %v498
      %v501 = vmul.f32 %v495, %v498
      %v502 = vld [vmem:[%s7] sm:$0x1]
      %v504 = vperm.slane %v502, 0
      %v506 = vadd.f32 %v500, %v504
      %v507 = vadd.f32 %v501, %v504
      %s508 = sadd.s32 %s24, %s25
      %s509 = smul.u32 %s508, 16
      %s510 = sld [smem:[#allocation3]]
      %s511 = sadd.s32 %s509, 16
      %p512 = scmp.le.s32.totalorder %s511, %s510
      // Predicated region
      $region53: #{megan_forward.2} parent=47 // pred_check
        %p513 = pneg %p512
      $region54: #{megan_forward.2} parent=47 // pred_check_branch
        %515 = sbr.rel (%p513) target = $region56
      $region55: #{megan_forward.2} parent=47 // pred_region
        %v516 = vld [vmem:[%s313] sm:$0xff]
        %v517 = vadd.f32 %v506, %v507
        %v518 = vadd.f32 %v516, %v517
        %519 = vst.msk [vmem:[%s313] sm:$0xff] %vm355, %v518
      $region56: #{megan_forward.2} parent=47 // pred_fallthru
        _
      %p520 = scmp.gt.s32.totalorder %s511, %s510
      // Predicated region
      $region57: #{megan_forward.2} parent=47 // pred_check
        %p521 = pneg %p520
      $region58: #{megan_forward.2} parent=47 // pred_check_branch
        %523 = sbr.rel (%p521) target = $region60
      $region59: #{megan_forward.2} parent=47 // pred_region
        %v524 = vlaneseq
        %v525 = vshrl.u32 %v524, 7
        %v526 = vadd.s32 %v525, 8
        %v527 = vstv %s509
        %v528 = vadd.s32 %v525, %v527
        %v529 = vadd.s32 %v526, %v527
        %v530 = vstv %s510
        %vm531 = vcmp.lt.s32.totalorder %v528, %v530
        %vm532 = vcmp.lt.s32.totalorder %v529, %v530
        %v533 = vsel %vm531, 1, 0
        %v534 = vsel %vm532, 1, 0
        %vm535 = vcmp.eq.s32.totalorder %v533, 1
        %vm536 = vcmp.eq.s32.totalorder %v534, 1
        %v537 = vsel %vm535, %v506, 0.0
        %v538 = vsel %vm536, %v507, 0.0
        %v539 = vld [vmem:[%s313] sm:$0xff]
        %v540 = vadd.f32 %v537, %v538
        %v541 = vadd.f32 %v539, %v540
        %542 = vst.msk [vmem:[%s313] sm:$0xff] %vm355, %v541
      $region60: #{megan_forward.2} parent=47 // pred_fallthru
        _
      %p543 = scmp.lt.s32.totalorder %s24, 1
      %s544 = scalar_select %p543, %s24, 1
      %s545 = smul.addr %s544, 8
      %s546 = scalar_lea.vmem %s8, %s545
      // Predicated region
      $region61: #{megan_forward.2} parent=47 // pred_check
        %p547 = pneg %p208
      $region62: #{megan_forward.2} parent=47 // pred_check_branch
        %549 = sbr.rel (%p547) target = $region64
      $region63: #{megan_forward.2} parent=47 // pred_region
        _
      $region64: #{megan_forward.2} parent=47 // pred_fallthru
        _
    $region48: #{megan_forward.2} parent=5 // pred_fallthru
      _
    %p550 = scmp.le.s32.totalorder 2, %s15
    // Predicated region
    $region65: #{megan_forward.2} parent=5 // pred_check
      %p551 = pneg %p550
    $region66: #{megan_forward.2} parent=5 // pred_check_branch
      %553 = sbr.rel (%p551) target = $region68
    $region67: #{megan_forward.2} parent=5 // pred_region
      %s554 = ssub.s32 %s15, 2
      // Predicated region
      $region69: #{megan_forward.2} parent=67 // pred_check
        %p555 = pneg %p214
      $region70: #{megan_forward.2} parent=67 // pred_check_branch
        %557 = sbr.rel (%p555) target = $region72
      $region71: #{megan_forward.2} parent=67 // pred_region
        %p558 = scmp.lt.s32.totalorder %s26, 1
        %s559 = scalar_select %p558, %s26, 1
        %s560 = smul.addr %s559, 8
        %s561 = scalar_lea.vmem %s8, %s560
      $region72: #{megan_forward.2} parent=67 // pred_fallthru
        _
    $region68: #{megan_forward.2} parent=5 // pred_fallthru
      _
  $region6: #{megan_forward.2} parent=0 // loop_footer
    %s19 = sadd.s32 1, %s15
  $region7: #{megan_forward.2} parent=0 // loop_footer_branch
    %14 = sbr.rel target = $region3
  $region8: #{megan_forward.2} parent=0 // loop_exit
    _

</llo_original>
